<compile_context>
chip_gen: v7x
topology: tpu7x:2x2x1
jax: 0.10.0
libtpu: 0.0.40
codegen_flags: <defaults>
</compile_context>

<pallas_src>
import functools

import jax
import jax.numpy as jnp
from jax.experimental import pallas as pl
from jax.experimental.pallas import tpu as pltpu

LANES = 128
NSPLIT = 2                   # leading "parallel" grid axis (one per TC on v7x)
MAX_TILE_BYTES = 1 << 20     # ~1 MiB per input per tile


def _cdiv(a, b):
    return -(-a // b)


def _round_up(a, b):
    return _cdiv(a, b) * b


def _mixed_loss_kernel(n_ref, pred_ref, target_ref, out_ref, *,
                       tile_rows, steps_per_split):
    """Accumulate per-lane [sum_sq, sum_abs, valid_count] partial sums.

    n_ref      : SMEM (1,) int32        -- true (unpadded) element count
    pred_ref   : VMEM (tile_rows, 128)  -- native dtype
    target_ref : VMEM (tile_rows, 128)  -- native dtype
    out_ref    : VMEM (3, 8, 128) f32   -- per-split partials, revisited across
                                           the inner (reduction) grid axis
    """
    i = pl.program_id(1)

    @pl.when(i == 0)
    def _():
        out_ref[...] = jnp.zeros_like(out_ref)

    t = target_ref[...].astype(jnp.float32)
    p = pred_ref[...].astype(jnp.float32)

    # Global flat element index of this tile (logical, *unclamped* block index)
    # -> masks both the ragged tail and any duplicated/OOB edge rows.
    blk = pl.program_id(0) * steps_per_split + i
    base = blk * (tile_rows * LANES)
    row = jax.lax.broadcasted_iota(jnp.int32, (tile_rows, LANES), 0)
    lane = jax.lax.broadcasted_iota(jnp.int32, (tile_rows, LANES), 1)
    in_range = (base + row * LANES + lane) < n_ref[0]

    valid = jnp.logical_and(t > 0.0, in_range)
    d = t - p
    sq = jnp.where(valid, d * d, 0.0)
    ab = jnp.where(valid, jnp.abs(d), 0.0)
    cnt = jnp.where(valid, 1.0, 0.0)

    # Fold the tile down to an (8, 128) vreg shape with pure VPU adds
    # (the reshape only regroups sublanes; no cross-lane movement).
    g = tile_rows // 8
    sq_p = jnp.sum(sq.reshape(g, 8, LANES), axis=0)
    ab_p = jnp.sum(ab.reshape(g, 8, LANES), axis=0)
    cnt_p = jnp.sum(cnt.reshape(g, 8, LANES), axis=0)

    out_ref[0] = out_ref[0] + sq_p
    out_ref[1] = out_ref[1] + ab_p
    out_ref[2] = out_ref[2] + cnt_p


def mixed_loss(pred, target, lmbda=0.0, lmbda2=0.0):
    """Pallas equivalent of MixedLoss(lmbda, lmbda2).forward(pred, target)."""
    del lmbda  # the reference forward() only uses lmbda2

    dt = jnp.promote_types(pred.dtype, target.dtype)
    flat_p = pred.reshape(-1).astype(dt)    # no-op when dtypes already match
    flat_t = target.reshape(-1).astype(dt)
    n = flat_p.shape[0]

    # At most a (<128-element) tail pad to get a lane-dense 2-D view; the pad
    # values are irrelevant (masked in-kernel via idx < n). No pad / no copy
    # when n is already a multiple of 128.
    pad = (-n) % LANES
    if pad:
        flat_p = jnp.pad(flat_p, (0, pad))
        flat_t = jnp.pad(flat_t, (0, pad))
    rows = (n + pad) // LANES
    p2 = flat_p.reshape(rows, LANES)
    t2 = flat_t.reshape(rows, LANES)

    # Tile sizing: as large as ~1 MiB per input (near HBM roofline), sublane
    # multiple matching dtype packing (8 for f32 / 16 for bf16 / 32 for int8).
    itemsize = jnp.dtype(dt).itemsize
    mult = max(8, 32 // itemsize)
    max_rows = max(mult, (MAX_TILE_BYTES // (LANES * itemsize)) // mult * mult)
    tile_rows = min(max_rows, _round_up(rows, mult))

    total_blocks = _cdiv(rows, tile_rows)
    steps_per_split = _cdiv(total_blocks, NSPLIT)

    def data_map(c, i):
        # Clamp so a split never points a DMA at a fully out-of-range block;
        # the kernel recomputes the logical (unclamped) index, so any
        # duplicated block contributes exactly zero.
        return (jnp.minimum(c * steps_per_split + i, total_blocks - 1), 0)

    kernel = functools.partial(_mixed_loss_kernel,
                               tile_rows=tile_rows,
                               steps_per_split=steps_per_split)

    n_arr = jnp.asarray(n, jnp.int32).reshape(1)

    partials = pl.pallas_call(
        kernel,
        out_shape=jax.ShapeDtypeStruct((NSPLIT * 3, 8, LANES), jnp.float32),
        grid=(NSPLIT, steps_per_split),
        in_specs=[
            pl.BlockSpec(memory_space=pltpu.MemorySpace.SMEM),   # n (scalar)
            pl.BlockSpec((tile_rows, LANES), data_map),          # pred tile
            pl.BlockSpec((tile_rows, LANES), data_map),          # target tile
        ],
        out_specs=pl.BlockSpec((3, 8, LANES), lambda c, i: (c, 0, 0)),
        compiler_params=pltpu.CompilerParams(
            dimension_semantics=("parallel", "arbitrary")),
    )(n_arr, p2, t2)

    # Tiny epilogue in XLA: one cross-lane reduce + the sqrt / divides.
    sums = jnp.sum(partials.reshape(NSPLIT, 3, 8, LANES), axis=(0, 2, 3))
    sum_sq, sum_abs, count = sums[0], sums[1], sums[2]
    rmse = jnp.sqrt(sum_sq / count)
    mae = sum_abs / count
    return rmse + lmbda2 * mae


def _reference(pred, target, lmbda2):
    p = pred.astype(jnp.float32)
    t = target.astype(jnp.float32)
    valid = t > 0.0
    d = t - p
    cnt = jnp.sum(valid.astype(jnp.float32))
    mse = jnp.sum(jnp.where(valid, d * d, 0.0)) / cnt
    mae = jnp.sum(jnp.where(valid, jnp.abs(d), 0.0)) / cnt
    return jnp.sqrt(mse) + lmbda2 * mae


if __name__ == "__main__":
    key = jax.random.PRNGKey(0)
    k1, k2, k3, k4 = jax.random.split(key, 4)
    lmbda2 = 0.5

    # Depth-estimation-style NCHW inputs: pred > 0, target has invalid (<=0) px.
    pred = jax.random.uniform(k1, (2, 4, 16, 16), jnp.float32, 0.5, 2.0)
    target = jax.random.uniform(k2, (2, 4, 16, 16), jnp.float32, -0.5, 2.0)

    loss = jax.block_until_ready(mixed_loss(pred, target, lmbda=0.0, lmbda2=lmbda2))
    ref = _reference(pred, target, lmbda2)
    assert jnp.allclose(loss, ref, rtol=1e-5, atol=1e-6), (loss, ref)

    # Native-dtype (bf16) + ragged-size path (n = 4000, not a multiple of 128).
    pred_b = jax.random.uniform(k3, (2, 4, 25, 20), jnp.float32, 0.5, 2.0).astype(jnp.bfloat16)
    target_b = jax.random.uniform(k4, (2, 4, 25, 20), jnp.float32, -0.5, 2.0).astype(jnp.bfloat16)

    loss_b = jax.block_until_ready(mixed_loss(pred_b, target_b, lmbda=0.0, lmbda2=lmbda2))
    ref_b = _reference(pred_b, target_b, lmbda2)
    assert jnp.allclose(loss_b, ref_b, rtol=1e-5, atol=1e-6), (loss_b, ref_b)

    print("KERNEL_OK")
</pallas_src>

<mosaic_0001>
module attributes {stable_mosaic.version = 11 : i64} {
  func.func @_mixed_loss_kernel(%arg0: i32, %arg1: i32, %arg2: memref<1xi32, #tpu.memory_space<smem>>, %arg3: memref<16x128xf32, #tpu.memory_space<vmem>>, %arg4: memref<16x128xf32, #tpu.memory_space<vmem>>, %arg5: memref<3x8x128xf32, #tpu.memory_space<vmem>>) attributes {dimension_semantics = [#tpu.dimension_semantics<parallel>, #tpu.dimension_semantics<arbitrary>], iteration_bounds = array<i64: 2, 1>, scalar_prefetch = 0 : i64, scratch_operands = 0 : i64, tpu.core_type = #tpu.core_type<tc>, window_params = [{transform_indices = @transform_0, window_bounds = array<i64: 1>}, {transform_indices = @transform_1, window_bounds = array<i64: 16, 128>}, {transform_indices = @transform_2, window_bounds = array<i64: 16, 128>}, {transform_indices = @transform_3, window_bounds = array<i64: 3, 8, 128>}]} {
    %c0_i32 = arith.constant 0 : i32
    %0 = arith.cmpi eq, %arg1, %c0_i32 : i32
    %1 = arith.extui %0 : i1 to i32
    %c0_i32_0 = arith.constant 0 : i32
    %2 = arith.cmpi ne, %1, %c0_i32_0 : i32
    scf.if %2 {
      %cst_28 = arith.constant 0.000000e+00 : f32
      %55 = vector.broadcast %cst_28 : f32 to vector<3x8x128xf32>
      %c0_29 = arith.constant 0 : index
      %c0_30 = arith.constant 0 : index
      %c0_31 = arith.constant 0 : index
      %56 = vector.load %arg5[%c0_29, %c0_30, %c0_31] : memref<3x8x128xf32, #tpu.memory_space<vmem>>, vector<3x8x128xf32>
      tpu.vector_store %arg5[%c0_29, %c0_30, %c0_31], %55 {strides = array<i32>} : memref<3x8x128xf32, #tpu.memory_space<vmem>>, vector<3x8x128xf32>,
    } else {
    }
    %c0 = arith.constant 0 : index
    %c0_1 = arith.constant 0 : index
    %3 = vector.load %arg4[%c0, %c0_1] : memref<16x128xf32, #tpu.memory_space<vmem>>, vector<16x128xf32>
    %c0_2 = arith.constant 0 : index
    %c0_3 = arith.constant 0 : index
    %4 = vector.load %arg3[%c0_2, %c0_3] : memref<16x128xf32, #tpu.memory_space<vmem>>, vector<16x128xf32>
    %c1_i32 = arith.constant 1 : i32
    %5 = arith.muli %arg0, %c1_i32 : i32
    %6 = arith.addi %5, %arg1 : i32
    %c2048_i32 = arith.constant 2048 : i32
    %7 = arith.muli %6, %c2048_i32 : i32
    %8 = tpu.iota {dimensions = array<i32: 0>} : vector<16x128xi32>
    %9 = tpu.iota {dimensions = array<i32: 1>} : vector<16x128xi32>
    %c128_i32 = arith.constant 128 : i32
    %10 = vector.broadcast %c128_i32 : i32 to vector<16x128xi32>
    %11 = arith.muli %8, %10 : vector<16x128xi32>
    %12 = vector.broadcast %7 : i32 to vector<16x128xi32>
    %13 = arith.addi %12, %11 : vector<16x128xi32>
    %14 = arith.addi %13, %9 : vector<16x128xi32>
    %c0_4 = arith.constant 0 : index
    %15 = memref.load %arg2[%c0_4] : memref<1xi32, #tpu.memory_space<smem>>
    %16 = vector.broadcast %15 : i32 to vector<16x128xi32>
    %17 = arith.cmpi slt, %14, %16 : vector<16x128xi32>
    %cst = arith.constant 0.000000e+00 : f32
    %18 = vector.broadcast %cst : f32 to vector<16x128xf32>
    %19 = arith.cmpf ogt, %3, %18 : vector<16x128xf32>
    %20 = arith.andi %19, %17 : vector<16x128xi1>
    %21 = arith.subf %3, %4 : vector<16x128xf32>
    %22 = arith.mulf %21, %21 : vector<16x128xf32>
    %cst_5 = arith.constant 0.000000e+00 : f32
    %23 = vector.broadcast %cst_5 : f32 to vector<16x128xf32>
    %24 = arith.select %20, %22, %23 : vector<16x128xi1>, vector<16x128xf32>
    %25 = math.absf %21 : vector<16x128xf32>
    %cst_6 = arith.constant 0.000000e+00 : f32
    %26 = vector.broadcast %cst_6 : f32 to vector<16x128xf32>
    %27 = arith.select %20, %25, %26 : vector<16x128xi1>, vector<16x128xf32>
    %cst_7 = arith.constant 1.000000e+00 : f32
    %cst_8 = arith.constant 0.000000e+00 : f32
    %28 = vector.broadcast %cst_7 : f32 to vector<16x128xf32>
    %29 = vector.broadcast %cst_8 : f32 to vector<16x128xf32>
    %30 = arith.select %20, %28, %29 : vector<16x128xi1>, vector<16x128xf32>
    %31 = vector.shape_cast %24 : vector<16x128xf32> to vector<2x8x128xf32>
    %cst_9 = arith.constant dense<0.000000e+00> : vector<8x128xf32>
    %32 = vector.multi_reduction <add>, %31, %cst_9 [0] : vector<2x8x128xf32> to vector<8x128xf32>
    %33 = vector.shape_cast %27 : vector<16x128xf32> to vector<2x8x128xf32>
    %cst_10 = arith.constant dense<0.000000e+00> : vector<8x128xf32>
    %34 = vector.multi_reduction <add>, %33, %cst_10 [0] : vector<2x8x128xf32> to vector<8x128xf32>
    %35 = vector.shape_cast %30 : vector<16x128xf32> to vector<2x8x128xf32>
    %cst_11 = arith.constant dense<0.000000e+00> : vector<8x128xf32>
    %36 = vector.multi_reduction <add>, %35, %cst_11 [0] : vector<2x8x128xf32> to vector<8x128xf32>
    %c0_12 = arith.constant 0 : index
    %c0_13 = arith.constant 0 : index
    %c0_14 = arith.constant 0 : index
    %37 = vector.load %arg5[%c0_12, %c0_13, %c0_14] : memref<3x8x128xf32, #tpu.memory_space<vmem>>, vector<1x8x128xf32>
    %38 = vector.shape_cast %37 : vector<1x8x128xf32> to vector<8x128xf32>
    %39 = arith.addf %38, %32 : vector<8x128xf32>
    %c0_15 = arith.constant 0 : index
    %c0_16 = arith.constant 0 : index
    %c0_17 = arith.constant 0 : index
    %40 = vector.load %arg5[%c0_15, %c0_16, %c0_17] : memref<3x8x128xf32, #tpu.memory_space<vmem>>, vector<1x8x128xf32>
    %41 = vector.shape_cast %40 : vector<1x8x128xf32> to vector<8x128xf32>
    %42 = vector.shape_cast %39 : vector<8x128xf32> to vector<1x8x128xf32>
    tpu.vector_store %arg5[%c0_15, %c0_16, %c0_17], %42 {strides = array<i32>} : memref<3x8x128xf32, #tpu.memory_space<vmem>>, vector<1x8x128xf32>,
    %c1 = arith.constant 1 : index
    %c0_18 = arith.constant 0 : index
    %c0_19 = arith.constant 0 : index
    %43 = vector.load %arg5[%c1, %c0_18, %c0_19] : memref<3x8x128xf32, #tpu.memory_space<vmem>>, vector<1x8x128xf32>
    %44 = vector.shape_cast %43 : vector<1x8x128xf32> to vector<8x128xf32>
    %45 = arith.addf %44, %34 : vector<8x128xf32>
    %c1_20 = arith.constant 1 : index
    %c0_21 = arith.constant 0 : index
    %c0_22 = arith.constant 0 : index
    %46 = vector.load %arg5[%c1_20, %c0_21, %c0_22] : memref<3x8x128xf32, #tpu.memory_space<vmem>>, vector<1x8x128xf32>
    %47 = vector.shape_cast %46 : vector<1x8x128xf32> to vector<8x128xf32>
    %48 = vector.shape_cast %45 : vector<8x128xf32> to vector<1x8x128xf32>
    tpu.vector_store %arg5[%c1_20, %c0_21, %c0_22], %48 {strides = array<i32>} : memref<3x8x128xf32, #tpu.memory_space<vmem>>, vector<1x8x128xf32>,
    %c2 = arith.constant 2 : index
    %c0_23 = arith.constant 0 : index
    %c0_24 = arith.constant 0 : index
    %49 = vector.load %arg5[%c2, %c0_23, %c0_24] : memref<3x8x128xf32, #tpu.memory_space<vmem>>, vector<1x8x128xf32>
    %50 = vector.shape_cast %49 : vector<1x8x128xf32> to vector<8x128xf32>
    %51 = arith.addf %50, %36 : vector<8x128xf32>
    %c2_25 = arith.constant 2 : index
    %c0_26 = arith.constant 0 : index
    %c0_27 = arith.constant 0 : index
    %52 = vector.load %arg5[%c2_25, %c0_26, %c0_27] : memref<3x8x128xf32, #tpu.memory_space<vmem>>, vector<1x8x128xf32>
    %53 = vector.shape_cast %52 : vector<1x8x128xf32> to vector<8x128xf32>
    %54 = vector.shape_cast %51 : vector<8x128xf32> to vector<1x8x128xf32>
    tpu.vector_store %arg5[%c2_25, %c0_26, %c0_27], %54 {strides = array<i32>} : memref<3x8x128xf32, #tpu.memory_space<vmem>>, vector<1x8x128xf32>,
    return
  }
  func.func @transform_0(%arg0: i32, %arg1: i32) -> i32 {
    %c0_i32 = arith.constant 0 : i32
    %c0_i32_0 = arith.constant 0 : i32
    return %c0_i32 : i32
  }
  func.func @transform_1(%arg0: i32, %arg1: i32) -> (i32, i32) {
    %c1_i32 = arith.constant 1 : i32
    %0 = arith.muli %arg0, %c1_i32 : i32
    %1 = arith.addi %0, %arg1 : i32
    %c0_i32 = arith.constant 0 : i32
    %2 = arith.minsi %1, %c0_i32 : i32
    %c0_i32_0 = arith.constant 0 : i32
    %c0_i32_1 = arith.constant 0 : i32
    return %2, %c0_i32_0 : i32, i32
  }
  func.func @transform_2(%arg0: i32, %arg1: i32) -> (i32, i32) {
    %c1_i32 = arith.constant 1 : i32
    %0 = arith.muli %arg0, %c1_i32 : i32
    %1 = arith.addi %0, %arg1 : i32
    %c0_i32 = arith.constant 0 : i32
    %2 = arith.minsi %1, %c0_i32 : i32
    %c0_i32_0 = arith.constant 0 : i32
    %c0_i32_1 = arith.constant 0 : i32
    return %2, %c0_i32_0 : i32, i32
  }
  func.func @transform_3(%arg0: i32, %arg1: i32) -> (i32, i32, i32) {
    %c0_i32 = arith.constant 0 : i32
    %c0_i32_0 = arith.constant 0 : i32
    %c0_i32_1 = arith.constant 0 : i32
    return %arg0, %c0_i32, %c0_i32_0 : i32, i32, i32
  }
}

</mosaic_0001>

<llo_original>
// kernel: tpu_custom_call.1
$region0: #{tpu_custom_call.1}
  #allocation0 [shape = 'u32[]', space=smem, size = 0x4, offset = 0x4, fixed_abs, tag = 'smem constant byte address 0x4 - core index']
  #allocation1 [shape = 'u32[144,128]{1,0:T(1,128)}', space=vmem, size = 0x12000, scoped, tag = 'internal scratch']
  #allocation2 [shape = 's32[1]{0:T(128)S(6)}', space=smem, size = 0x200, scoped, tag = 'scoped memory for tpu_custom_call.1']
  %s0 = inlined_call_operand.<no memory space> [shape: s32[1], index: 0, kind: input, shape index: {}]
  %s1 = inlined_call_operand.hbm [shape: f32[16,128], index: 1, kind: input, shape index: {}]
  %s2 = inlined_call_operand.hbm [shape: f32[16,128], index: 2, kind: input, shape index: {}]
  %s3 = inlined_call_operand.hbm [shape: f32[6,8,128], index: 3, kind: output, shape index: {}]
  %s4 = sld [smem:[#allocation0]]
  $region57: #{tpu_custom_call.1} parent=0
    _
  %s6 = ssub.s32 1, %s4
  %s7 = scalar_select 0, %s6, %s4
  %8 = sst [smem:[#allocation2]] %s0
  $region1: #{tpu_custom_call.1} parent=0
    #allocation3 [shape = 'u8[16384]{0}', space=vmem, size = 0x4000, scoped, tag = 'input window, operand 1']
    #allocation4 [shape = 's32[2]{0}', space=sflag, size = 0x8, scoped, tag = 'scoped memory for tpu_custom_call.1']
    #allocation5 [shape = 's32[2]{0}', space=sflag, size = 0x8, scoped, tag = 'scoped memory for tpu_custom_call.1']
    #allocation6 [shape = 'u8[16384]{0}', space=vmem, size = 0x4000, scoped, tag = 'input window, operand 2']
    #allocation7 [shape = 's32[2]{0}', space=sflag, size = 0x8, scoped, tag = 'scoped memory for tpu_custom_call.1']
    #allocation8 [shape = 'u8[24576]{0}', space=vmem, size = 0x6000, scoped, tag = 'output window, operand 0']
    %9 = vsyncpa [#allocation4], 0
    %s10 = scalar_lea.sflag [#allocation4], 1
    %11 = vsyncpa %s10, 0
    %12 = vsyncpa [#allocation7], 0
    %s13 = scalar_lea.sflag [#allocation7], 1
    %14 = vsyncpa %s13, 0
    %15 = vsyncpa [#allocation5], 0
    %s16 = scalar_lea.sflag [#allocation5], 1
    %17 = vsyncpa %s16, 0
    loop: start=0, step=1, limit=4
    $region2: #{tpu_custom_call.1} parent=1 // loop_pre_header
      _
    $region3: #{tpu_custom_call.1} parent=1 // loop_header
      %s19 = sphi 0, %s23
      %p20 = scmp.ge.s32.totalorder %s19, 4
      %s26 = sphi 0, %s38
      %s27 = sphi 0, %s34
      %s28 = sphi 0, %s26
      %s29 = sphi 0, %s27
      %s30 = sphi 0, %s28
      %s31 = sphi 0, %s29
      %s39 = sphi 0, %s39
      %s41 = sphi 0, %s39
      %s42 = sphi 0, %s41
      %s56 = sphi 0, %s42
      %s68 = sphi 0, %s70
      %s71 = sphi 0, %s68
      %s72 = sphi 0, %s71
      %s88 = sphi 0, %s72
      %s100 = sphi 0, %s102
      %s103 = sphi 0, %s100
      %s104 = sphi 0, %s103
      %s120 = sphi 0, %s104
      %s126 = sphi 0, %s128
      %s129 = sphi 0, %s126
      %s130 = sphi 0, %s129
      %s146 = sphi 0, %s130
    $region4: #{tpu_custom_call.1} parent=1 // loop_header_branch
      %22 = sbr.rel (%p20) target = $region8
    $region5: #{tpu_custom_call.1} parent=1 // loop_body
      %s24 = ssub.s32 %s19, 1
      %s25 = ssub.s32 %s19, 2
      %s32 = sadd.s32 1, %s27
      %p33 = scmp.ge.s32.totalorder %s32, 1
      %s34 = scalar_select %p33, 0, %s32
      %s35 = sadd.s32 1, %s26
      %s36 = scalar_select %p33, %s35, %s26
      %p37 = scmp.ge.s32.totalorder %s36, 2
      %s38 = scalar_select %p37, 0, %s36
      %s40 = sadd.s32 %s39, 1
      %p43 = scmp.eq.s32.totalorder %s19, 1
      %p44 = scmp.ne.s32.totalorder %s39, %s41
      %p45 = scmp.eq.s32.totalorder %s19, 0
      %p46 = por %p44, %p45
      %p47 = scmp.ne.s32.totalorder %s39, %s41
      %p48 = scmp.eq.s32.totalorder %s24, 1
      %p49 = por %p47, %p48
      %p50 = scmp.ne.s32.totalorder %s41, %s42
      %p51 = scmp.eq.s32.totalorder %s24, 0
      %p52 = por %p50, %p51
      %p53 = scmp.ne.s32.totalorder %s41, %s42
      %p54 = scmp.eq.s32.totalorder %s25, 1
      %p55 = por %p53, %p54
      %p57 = scmp.ne.s32.totalorder %s42, %s56
      %p58 = scmp.eq.s32.totalorder %s25, 0
      %p59 = por %p57, %p58
      %s60 = sadd.s32 %s26, %s27
      %p61 = scmp.lt.s32.totalorder %s60, 0
      %s62 = scalar_select %p61, %s60, 0
      %s63 = sadd.s32 %s38, %s34
      %p64 = scmp.lt.s32.totalorder %s63, 0
      %s65 = scalar_select %p64, %s63, 0
      %s66 = ssub.s32 %s62, %s65
      %p67 = scmp.eq.s32.totalorder %s66, 0
      %s69 = sadd.s32 %s68, 1
      %s70 = scalar_select %p67, %s68, %s69
      %p73 = pneg %p67
      %p74 = scmp.eq.s32.totalorder %s19, 1
      %p75 = por %p73, %p74
      %p76 = scmp.ne.s32.totalorder %s68, %s71
      %p77 = scmp.eq.s32.totalorder %s19, 0
      %p78 = por %p76, %p77
      %p79 = scmp.ne.s32.totalorder %s68, %s71
      %p80 = scmp.eq.s32.totalorder %s24, 1
      %p81 = por %p79, %p80
      %p82 = scmp.ne.s32.totalorder %s71, %s72
      %p83 = scmp.eq.s32.totalorder %s24, 0
      %p84 = por %p82, %p83
      %p85 = scmp.ne.s32.totalorder %s71, %s72
      %p86 = scmp.eq.s32.totalorder %s25, 1
      %p87 = por %p85, %p86
      %p89 = scmp.ne.s32.totalorder %s72, %s88
      %p90 = scmp.eq.s32.totalorder %s25, 0
      %p91 = por %p89, %p90
      %s92 = sadd.s32 %s26, %s27
      %p93 = scmp.lt.s32.totalorder %s92, 0
      %s94 = scalar_select %p93, %s92, 0
      %s95 = sadd.s32 %s38, %s34
      %p96 = scmp.lt.s32.totalorder %s95, 0
      %s97 = scalar_select %p96, %s95, 0
      %s98 = ssub.s32 %s94, %s97
      %p99 = scmp.eq.s32.totalorder %s98, 0
      %s101 = sadd.s32 %s100, 1
      %s102 = scalar_select %p99, %s100, %s101
      %p105 = pneg %p99
      %p106 = scmp.eq.s32.totalorder %s19, 1
      %p107 = por %p105, %p106
      %p108 = scmp.ne.s32.totalorder %s100, %s103
      %p109 = scmp.eq.s32.totalorder %s19, 0
      %p110 = por %p108, %p109
      %p111 = scmp.ne.s32.totalorder %s100, %s103
      %p112 = scmp.eq.s32.totalorder %s24, 1
      %p113 = por %p111, %p112
      %p114 = scmp.ne.s32.totalorder %s103, %s104
      %p115 = scmp.eq.s32.totalorder %s24, 0
      %p116 = por %p114, %p115
      %p117 = scmp.ne.s32.totalorder %s103, %s104
      %p118 = scmp.eq.s32.totalorder %s25, 1
      %p119 = por %p117, %p118
      %p121 = scmp.ne.s32.totalorder %s104, %s120
      %p122 = scmp.eq.s32.totalorder %s25, 0
      %p123 = por %p121, %p122
      %s124 = ssub.s32 %s26, %s38
      %p125 = scmp.eq.s32.totalorder %s124, 0
      %s127 = sadd.s32 %s126, 1
      %s128 = scalar_select %p125, %s126, %s127
      %p131 = pneg %p125
      %p132 = scmp.eq.s32.totalorder %s19, 1
      %p133 = por %p131, %p132
      %p134 = scmp.ne.s32.totalorder %s126, %s129
      %p135 = scmp.eq.s32.totalorder %s19, 0
      %p136 = por %p134, %p135
      %p137 = scmp.ne.s32.totalorder %s126, %s129
      %p138 = scmp.eq.s32.totalorder %s24, 1
      %p139 = por %p137, %p138
      %p140 = scmp.ne.s32.totalorder %s129, %s130
      %p141 = scmp.eq.s32.totalorder %s24, 0
      %p142 = por %p140, %p141
      %p143 = scmp.ne.s32.totalorder %s129, %s130
      %p144 = scmp.eq.s32.totalorder %s25, 1
      %p145 = por %p143, %p144
      %p147 = scmp.ne.s32.totalorder %s130, %s146
      %p148 = scmp.eq.s32.totalorder %s25, 0
      %p149 = por %p147, %p148
      %p150 = scmp.le.s32.totalorder 1, %s19
      %p151 = scmp.lt.s32.totalorder %s19, 3
      %p152 = pnand %p150, %p151
      %p153 = pneg %p152
      // Predicated region
      $region9: #{tpu_custom_call.1} parent=5 // pred_check
        _
      $region10: #{tpu_custom_call.1} parent=5 // pred_check_branch
        %155 = sbr.rel (%p152) target = $region12
      $region11: #{tpu_custom_call.1} parent=5 // pred_region
        %s156 = ssub.s32 %s19, 1
        // Predicated region
        $region13: #{tpu_custom_call.1} parent=11 // pred_check
          %p157 = pneg %p52
        $region14: #{tpu_custom_call.1} parent=11 // pred_check_branch
          %159 = sbr.rel (%p157) target = $region16
        $region15: #{tpu_custom_call.1} parent=11 // pred_region
          _
        $region16: #{tpu_custom_call.1} parent=11 // pred_fallthru
          _
      $region12: #{tpu_custom_call.1} parent=5 // pred_fallthru
        _
      %p160 = scmp.lt.s32.totalorder %s19, 2
      // Predicated region
      $region17: #{tpu_custom_call.1} parent=5 // pred_check
        %p161 = pneg %p160
      $region18: #{tpu_custom_call.1} parent=5 // pred_check_branch
        %163 = sbr.rel (%p161) target = $region20
      $region19: #{tpu_custom_call.1} parent=5 // pred_region
        // Predicated region
        $region21: #{tpu_custom_call.1} parent=19 // pred_check
          %p164 = pneg %p78
        $region22: #{tpu_custom_call.1} parent=19 // pred_check_branch
          %166 = sbr.rel (%p164) target = $region24
        $region23: #{tpu_custom_call.1} parent=19 // pred_region
          %s167 = sand.u32 %s68, 1
          %s168 = scalar_lea.sflag [#allocation4], %s167
          %s169 = sand.u32 %s68, 1
          %s170 = smul.addr %s169, 16
          %s171 = scalar_lea.vmem [#allocation3], %s170
          %s172 = sadd.s32 %s26, %s27
          %p173 = scmp.lt.s32.totalorder %s172, 0
          %s174 = scalar_select %p173, %s172, 0
          %s175 = smul.u32 2, %s174
          %s177 = ssub.s32 256, 256
          %178 = vsyncadd %s168, %s177
          %s179 = smul.addr %s175, 128
          %s180 = scalar_lea.hbm %s1, %s179
          %s181 = sshll.u32 %s171, 4
          %s182 = int_to_ptr.vmem [resolvable:$true] %s181
          %187 = dma.hbm_to_vmem [thread:$0]  %s180, 256, %s182, %s168, 128, 128, 8
        $region24: #{tpu_custom_call.1} parent=19 // pred_fallthru
          _
        // Predicated region
        $region25: #{tpu_custom_call.1} parent=19 // pred_check
          %p188 = pneg %p110
        $region26: #{tpu_custom_call.1} parent=19 // pred_check_branch
          %190 = sbr.rel (%p188) target = $region28
        $region27: #{tpu_custom_call.1} parent=19 // pred_region
          %s191 = sand.u32 %s100, 1
          %s192 = scalar_lea.sflag [#allocation7], %s191
          %s193 = sand.u32 %s100, 1
          %s194 = smul.addr %s193, 16
          %s195 = scalar_lea.vmem [#allocation6], %s194
          %s196 = sadd.s32 %s26, %s27
          %p197 = scmp.lt.s32.totalorder %s196, 0
          %s198 = scalar_select %p197, %s196, 0
          %s199 = smul.u32 2, %s198
          %s201 = ssub.s32 256, 256
          %202 = vsyncadd %s192, %s201
          %s203 = smul.addr %s199, 128
          %s204 = scalar_lea.hbm %s2, %s203
          %s205 = sshll.u32 %s195, 4
          %s206 = int_to_ptr.vmem [resolvable:$true] %s205
          %211 = dma.hbm_to_vmem [thread:$0]  %s204, 256, %s206, %s192, 128, 128, 8
        $region28: #{tpu_custom_call.1} parent=19 // pred_fallthru
          _
      $region20: #{tpu_custom_call.1} parent=5 // pred_fallthru
        _
      %p212 = scmp.le.s32.totalorder 1, %s19
      %p213 = scmp.lt.s32.totalorder %s19, 3
      %p214 = pnand %p212, %p213
      %p215 = pneg %p214
      // Predicated region
      $region29: #{tpu_custom_call.1} parent=5 // pred_check
        _
      $region30: #{tpu_custom_call.1} parent=5 // pred_check_branch
        %217 = sbr.rel (%p214) target = $region32
      $region31: #{tpu_custom_call.1} parent=5 // pred_region
        %s218 = ssub.s32 %s19, 1
        %s219 = sand.u32 %s71, 1
        %s220 = scalar_lea.sflag [#allocation4], %s219
        %s221 = sand.u32 %s71, 1
        %s222 = smul.addr %s221, 16
        %s223 = scalar_lea.vmem [#allocation3], %s222
        // Predicated region
        $region33: #{tpu_custom_call.1} parent=31 // pred_check
          %p224 = pneg %p84
        $region34: #{tpu_custom_call.1} parent=31 // pred_check_branch
          %226 = sbr.rel (%p224) target = $region36
        $region35: #{tpu_custom_call.1} parent=31 // pred_region
          %227 = dma.done %s220, 256
        $region36: #{tpu_custom_call.1} parent=31 // pred_fallthru
          _
        %s228 = sand.u32 %s103, 1
        %s229 = scalar_lea.sflag [#allocation7], %s228
        %s230 = sand.u32 %s103, 1
        %s231 = smul.addr %s230, 16
        %s232 = scalar_lea.vmem [#allocation6], %s231
        // Predicated region
        $region37: #{tpu_custom_call.1} parent=31 // pred_check
          %p233 = pneg %p116
        $region38: #{tpu_custom_call.1} parent=31 // pred_check_branch
          %235 = sbr.rel (%p233) target = $region40
        $region39: #{tpu_custom_call.1} parent=31 // pred_region
          %236 = dma.done %s229, 256
        $region40: #{tpu_custom_call.1} parent=31 // pred_fallthru
          _
        %p237 = pneg %p52
        %p238 = pneg %p49
        %s239 = sand.u32 %s71, 1
        %s240 = scalar_lea.sflag [#allocation4], %s239
        %s241 = sand.u32 %s71, 1
        %s242 = smul.addr %s241, 16
        %s243 = scalar_lea.vmem [#allocation3], %s242
        %p244 = pneg %p84
        %p245 = pneg %p81
        %s246 = sand.u32 %s103, 1
        %s247 = scalar_lea.sflag [#allocation7], %s246
        %s248 = sand.u32 %s103, 1
        %s249 = smul.addr %s248, 16
        %s250 = scalar_lea.vmem [#allocation6], %s249
        %p251 = pneg %p116
        %p252 = pneg %p113
        %p253 = pneg %p142
        %p254 = pneg %p139
        %s255 = sand.u32 %s129, 1
        %s256 = scalar_lea.sflag [#allocation5], %s255
        %s257 = sand.u32 %s129, 1
        %s258 = smul.addr %s257, 24
        %s259 = scalar_lea.vmem [#allocation8], %s258
        %s260 = sadd.s32 %s28, %s29
        %p261 = scmp.lt.s32.totalorder %s260, 0
        %s262 = scalar_select %p261, %s260, 0
        %s263 = smul.u32 2, %s262
        %s264 = sadd.s32 %s28, %s29
        %p265 = scmp.lt.s32.totalorder %s264, 0
        %s266 = scalar_select %p265, %s264, 0
        %s267 = smul.u32 2, %s266
        %s268 = smul.u32 3, %s28
        %p269 = scmp.eq.s32.totalorder %s29, 0
        // Predicated region
        $region41: #{tpu_custom_call.1} parent=31 // pred_check
          %p270 = pneg %p269
        $region42: #{tpu_custom_call.1} parent=31 // pred_check_branch
          %272 = sbr.rel (%p270) target = $region44
        $region43: #{tpu_custom_call.1} parent=31 // pred_region
          %273 = vst [vmem:[%s259] sm:$0xff] 0.0
          %274 = vst [vmem:[%s259 + $0x8] sm:$0xff] 0.0
          %275 = vst [vmem:[%s259 + $0x10] sm:$0xff] 0.0
        $region44: #{tpu_custom_call.1} parent=31 // pred_fallthru
          _
        %v276 = vld [vmem:[%s232] sm:$0xff]
        %v277 = vld [vmem:[%s232 + $0x8] sm:$0xff]
        %v278 = vld [vmem:[%s223] sm:$0xff]
        %v279 = vld [vmem:[%s223 + $0x8] sm:$0xff]
        %s280 = sadd.s32 %s28, %s29
        %s281 = smul.u32 %s280, 2048
        %v282 = vlaneseq
        %v283 = vshrl.u32 %v282, 7
        %v284 = vadd.s32 %v283, 8
        %v285 = vlaneseq
        %v286 = vand.u32 %v285, 127
        %v287 = vmul.u32 %v283, 128
        %v288 = vmul.u32 %v284, 128
        %v289 = vstv %s281
        %v290 = vadd.s32 %v289, %v287
        %v291 = vadd.s32 %v289, %v288
        %v292 = vadd.s32 %v290, %v286
        %v293 = vadd.s32 %v291, %v286
        %s294 = sld [smem:[#allocation2]]
        %v295 = vstv %s294
        %vm296 = vcmp.lt.s32.totalorder %v292, %v295
        %vm297 = vcmp.lt.s32.totalorder %v293, %v295
        %vm298 = vcmp.gt.f32.partialorder %v276, 0.0
        %vm299 = vcmp.gt.f32.partialorder %v277, 0.0
        %vm300 = vmand %vm298, %vm296
        %vm301 = vmand %vm299, %vm297
        %v302 = vsub.f32 %v276, %v278
        %v303 = vsub.f32 %v277, %v279
        %v304 = vmul.f32 %v302, %v302
        %v305 = vmul.f32 %v303, %v303
        %v306 = vsel %vm300, %v304, 0.0
        %v307 = vsel %vm301, %v305, 0.0
        %v308 = vand.u32 2147483647, %v302
        %v309 = vand.u32 2147483647, %v303
        %v310 = vsel %vm300, %v308, 0.0
        %v311 = vsel %vm301, %v309, 0.0
        %v312 = vsel %vm300, 1.0, 0.0
        %v313 = vsel %vm301, 1.0, 0.0
        %v314 = vadd.f32 %v306, %v307
        %v315 = vadd.f32 %v310, %v311
        %v316 = vadd.f32 %v312, %v313
        %v317 = vld [vmem:[%s259] sm:$0xff]
        %v318 = vadd.f32 %v317, %v314
        %319 = vst [vmem:[%s259] sm:$0xff] %v318
        %s320 = scalar_lea.vmem %s259, 8 [#allocation8]
        %v321 = vld [vmem:[%s320] sm:$0xff]
        %v322 = vadd.f32 %v321, %v315
        %323 = vst [vmem:[%s320] sm:$0xff] %v322
        %s324 = scalar_lea.vmem %s259, 16 [#allocation8]
        %v325 = vld [vmem:[%s324] sm:$0xff]
        %v326 = vadd.f32 %v325, %v316
        %327 = vst [vmem:[%s324] sm:$0xff] %v326
        %s328 = sand.u32 %s129, 1
        %s329 = scalar_lea.sflag [#allocation5], %s328
        %s330 = sand.u32 %s129, 1
        %s331 = smul.addr %s330, 24
        %s332 = scalar_lea.vmem [#allocation8], %s331
        // Predicated region
        $region45: #{tpu_custom_call.1} parent=31 // pred_check
          %p333 = pneg %p139
        $region46: #{tpu_custom_call.1} parent=31 // pred_check_branch
          %335 = sbr.rel (%p333) target = $region48
        $region47: #{tpu_custom_call.1} parent=31 // pred_region
          %s336 = smul.u32 3, %s28
          %s338 = ssub.s32 384, 384
          %339 = vsyncadd %s329, %s338
          %s340 = smul.addr %s336, 128
          %s341 = scalar_lea.hbm %s3, %s340
          %s342 = sshll.u32 %s332, 4
          %s343 = int_to_ptr.vmem [resolvable:$true] %s342
          %348 = dma.vmem_to_hbm [thread:$0]  %s343, 384, %s341, %s329, 128, 128, 8
        $region48: #{tpu_custom_call.1} parent=31 // pred_fallthru
          _
      $region32: #{tpu_custom_call.1} parent=5 // pred_fallthru
        _
      %p349 = scmp.le.s32.totalorder 2, %s19
      // Predicated region
      $region49: #{tpu_custom_call.1} parent=5 // pred_check
        %p350 = pneg %p349
      $region50: #{tpu_custom_call.1} parent=5 // pred_check_branch
        %352 = sbr.rel (%p350) target = $region52
      $region51: #{tpu_custom_call.1} parent=5 // pred_region
        %s353 = ssub.s32 %s19, 2
        // Predicated region
        $region53: #{tpu_custom_call.1} parent=51 // pred_check
          %p354 = pneg %p145
        $region54: #{tpu_custom_call.1} parent=51 // pred_check_branch
          %356 = sbr.rel (%p354) target = $region56
        $region55: #{tpu_custom_call.1} parent=51 // pred_region
          %s357 = sand.u32 %s130, 1
          %s358 = scalar_lea.sflag [#allocation5], %s357
          %s359 = sand.u32 %s130, 1
          %s360 = smul.addr %s359, 24
          %s361 = scalar_lea.vmem [#allocation8], %s360
          %362 = dma.done %s358, 384
        $region56: #{tpu_custom_call.1} parent=51 // pred_fallthru
          _
      $region52: #{tpu_custom_call.1} parent=5 // pred_fallthru
        _
    $region6: #{tpu_custom_call.1} parent=1 // loop_footer
      %s23 = sadd.s32 1, %s19
    $region7: #{tpu_custom_call.1} parent=1 // loop_footer_branch
      %18 = sbr.rel target = $region3
    $region8: #{tpu_custom_call.1} parent=1 // loop_exit
      _
    %363 = vsyncpa [#allocation4], 1
    %s364 = scalar_lea.sflag [#allocation4], 1
    %365 = vsyncpa %s364, 1
    %366 = vsyncpa [#allocation7], 1
    %s367 = scalar_lea.sflag [#allocation7], 1
    %368 = vsyncpa %s367, 1
    %369 = vsyncpa [#allocation5], 1
    %s370 = scalar_lea.sflag [#allocation5], 1
    %371 = vsyncpa %s370, 1

</llo_original>
